<compile_context>
chip_gen: v5e
topology: v5e:2x2
jax: 0.10.0
libtpu: 0.0.40
codegen_flags: <defaults>
</compile_context>

<pallas_src>
import functools

import jax
import jax.numpy as jnp
from jax import lax
from jax.experimental import pallas as pl
from jax.experimental.pallas import tpu as pltpu

EPS = 1e-5


def basic_block_kernel(x_ref, m_ref, w1_ref, g1_ref, b1_ref, w2_ref, g2_ref, b2_ref,
                       o_ref, *, width, compute_dtype):
    """Fused conv3x3 -> BN -> ReLU -> conv3x3 -> BN -> +x -> ReLU on a (Cp, N*H*W) slab.

    x_ref : (Cp, R)     f32  activation slab (also the residual identity), R = N*H*W
    m_ref : (9, R)      f32  0/1 validity mask per conv tap, tap order (kh, kw)
    w*_ref: (Cp, 9*Cp)  cdt  conv weight matrix, columns ordered (kh, kw, cin)
    g*/b* : (Cp, 1)     f32  BN affine parameters (zero in padded channel rows)
    o_ref : (Cp, R)     f32  output slab (lane-dense, full-sublane unmasked store)
    """
    cp, r = x_ref.shape
    inv_r = 1.0 / r
    offsets = [dh * width + dw for dh in (-1, 0, 1) for dw in (-1, 0, 1)]
    center = 4  # tap (dh, dw) == (0, 0)

    xf = x_ref[...]  # f32; reused unchanged as the residual identity

    def make_patch(act):
        # act: (Cp, R) f32 -> (9*Cp, R) im2col patch, assembled entirely in vregs (no scratch).
        # pltpu.roll wrap-around (cross-row / cross-image / slab ends) is zeroed by the tap mask.
        taps = []
        for t, d in enumerate(offsets):
            shifted = act if d == 0 else pltpu.roll(act, shift=(-d) % r, axis=1)
            if t != center:                      # center-tap mask is all ones -> skip multiply
                shifted = shifted * m_ref[t:t + 1, :]
            taps.append(shifted)
        # Single cast of the assembled patch right before the MXU (f32 VPU staging on all gens).
        return jnp.concatenate(taps, axis=0).astype(compute_dtype)

    def batchnorm(acc, g_ref, b_ref):
        # Batch statistics (biased variance) fused into a per-channel scale/shift FMA.
        # sum / sumsq are independent lane reductions; rsqrt lands on the (free) EUP slot.
        s = jnp.sum(acc, axis=1, keepdims=True)
        ss = jnp.sum(acc * acc, axis=1, keepdims=True)
        mean = s * inv_r
        var = jnp.maximum(ss * inv_r - mean * mean, 0.0)
        scale = g_ref[...] * lax.rsqrt(var + EPS)
        shift = b_ref[...] - mean * scale
        return acc * scale + shift

    # conv1 (single K = 9*Cp MXU matmul) -> bn1 -> relu
    acc1 = jnp.dot(w1_ref[...], make_patch(xf), preferred_element_type=jnp.float32)
    y1 = jnp.maximum(batchnorm(acc1, g1_ref, b1_ref), 0.0)

    # conv2 -> bn2
    acc2 = jnp.dot(w2_ref[...], make_patch(y1), preferred_element_type=jnp.float32)
    y2 = batchnorm(acc2, g2_ref, b2_ref)

    # residual add (stride=1, no downsample) + relu; lane-dense unmasked full-tile store.
    o_ref[...] = jnp.maximum(y2 + xf, 0.0)


@functools.partial(jax.jit, static_argnames=("compute_dtype",))
def basic_block_prim(x_nchw, w1, g1, b1, w2, g2, b2, compute_dtype=jnp.bfloat16):
    """x_nchw: [N, C, H, W] f32; conv weights OIHW [C, C, 3, 3]; BN gamma/beta [C].
    Returns [N, C, H, W] f32."""
    n, c, h, w = x_nchw.shape
    cout, cin_w, kh, kw = w1.shape
    assert (kh, kw) == (3, 3) and cin_w == c and cout == c and w2.shape == (c, c, 3, 3), (
        "residual add requires inplanes == planes, stride=1, downsample=None")
    r = n * h * w
    cp = ((c + 7) // 8) * 8       # sublane-pad channels -> full-tile loads/stores, aligned concat
    cdt = jnp.dtype(compute_dtype)

    # --- layout plumbing (XLA side) ----------------------------------------------------------
    # Lane-dense activation slab: channels on sublanes (padded to 8), all N*H*W pixels on lanes.
    x_slab = jnp.transpose(x_nchw, (1, 0, 2, 3)).reshape(c, r).astype(jnp.float32)
    x_slab = jnp.pad(x_slab, ((0, cp - c), (0, 0)))

    def weight_matrix(wgt):
        # OIHW -> (Cout, kh, kw, Cin), zero-pad channels, flatten to (Cp, 9*Cp), MXU dtype.
        wt = jnp.transpose(wgt, (0, 2, 3, 1))
        wt = jnp.pad(wt, ((0, cp - c), (0, 0), (0, 0), (0, cp - c)))
        return wt.reshape(cp, 9 * cp).astype(cdt)

    def affine(v):
        return jnp.pad(v.astype(jnp.float32), (0, cp - c)).reshape(cp, 1)

    wm1, wm2 = weight_matrix(w1), weight_matrix(w2)
    g1c, b1c, g2c, b2c = affine(g1), affine(b1), affine(g2), affine(b2)

    # 0/1 validity mask per conv tap ('same' padding); also zeroes every roll wrap-around lane.
    hh = jnp.arange(h).reshape(1, h, 1)
    ww = jnp.arange(w).reshape(1, 1, w)
    rows = []
    for dh in (-1, 0, 1):
        for dw in (-1, 0, 1):
            valid = ((hh + dh >= 0) & (hh + dh < h) & (ww + dw >= 0) & (ww + dw < w))
            rows.append(jnp.broadcast_to(valid, (n, h, w)).reshape(1, r))
    tap_mask = jnp.concatenate(rows, axis=0).astype(jnp.float32)         # (9, R) f32 staging

    # --- fused kernel --------------------------------------------------------------------------
    flops = 2 * (2 * r * (9 * cp) * cp)                                  # two 3x3 convs
    bytes_accessed = (2 * cp * r * 4                                     # x slab + out slab (f32)
                      + 9 * r * 4                                        # tap masks (f32)
                      + 2 * 9 * cp * cp * cdt.itemsize                   # two weight matrices
                      + 4 * cp * 4)                                      # BN affine params
    kernel = functools.partial(basic_block_kernel, width=w, compute_dtype=cdt)
    vmem = pl.BlockSpec(memory_space=pltpu.MemorySpace.VMEM)

    out_slab = pl.pallas_call(
        kernel,
        out_shape=jax.ShapeDtypeStruct((cp, r), jnp.float32),
        in_specs=[vmem] * 8,
        out_specs=vmem,
        cost_estimate=pl.CostEstimate(flops=flops, transcendentals=2 * cp,
                                      bytes_accessed=bytes_accessed),
        # ~100 KiB live at this toy size; re-derive per generation for the tiled design
        # (see TODO at top: ~96 MiB on v5e/v6e, ~40-48 MiB on v7x).
        compiler_params=pltpu.CompilerParams(vmem_limit_bytes=32 * 1024 * 1024),
    )(x_slab, tap_mask, wm1, g1c, b1c, wm2, g2c, b2c)

    return jnp.transpose(out_slab[:c].reshape(c, n, h, w), (1, 0, 2, 3))


def reference_forward(x, w1, g1, b1, w2, g2, b2):
    """Pure-JAX (XLA) reference with the same semantics, used to check the kernel."""
    def conv(z, wgt):
        return lax.conv_general_dilated(
            z, wgt, window_strides=(1, 1), padding=((1, 1), (1, 1)),
            dimension_numbers=("NCHW", "OIHW", "NCHW"))

    def bn(z, g, b):
        m = z.mean(axis=(0, 2, 3), keepdims=True)
        v = ((z - m) ** 2).mean(axis=(0, 2, 3), keepdims=True)
        return (z - m) * (g.reshape(1, -1, 1, 1) * lax.rsqrt(v + EPS)) + b.reshape(1, -1, 1, 1)

    y = jax.nn.relu(bn(conv(x, w1), g1, b1))
    y = bn(conv(y, w2), g2, b2)
    return jax.nn.relu(y + x)


if __name__ == "__main__":
    # BasicBlockPrim(inplanes=4, planes=4, stride=1, downsample=None); batch=2, spatial=16x16.
    N, C, H, W = 2, 4, 16, 16
    key = jax.random.PRNGKey(0)
    kx, kw1, kw2, kg1, kb1, kg2, kb2 = jax.random.split(key, 7)

    x = jax.random.normal(kx, (N, C, H, W), jnp.float32)
    w1 = 0.1 * jax.random.normal(kw1, (C, C, 3, 3), jnp.float32)       # OIHW (PyTorch layout)
    w2 = 0.1 * jax.random.normal(kw2, (C, C, 3, 3), jnp.float32)
    g1 = 1.0 + 0.1 * jax.random.normal(kg1, (C,), jnp.float32)
    b1 = 0.1 * jax.random.normal(kb1, (C,), jnp.float32)
    g2 = 1.0 + 0.1 * jax.random.normal(kg2, (C,), jnp.float32)
    b2 = 0.1 * jax.random.normal(kb2, (C,), jnp.float32)

    ref = reference_forward(x, w1, g1, b1, w2, g2, b2)

    # f32 MXU path: must reproduce the f32 reference tightly (also validates the roll+mask
    # staging and the one-pass BN against the two-pass XLA reference).
    out_f32 = jax.block_until_ready(
        basic_block_prim(x, w1, g1, b1, w2, g2, b2, compute_dtype=jnp.float32))
    assert out_f32.shape == (N, C, H, W)
    assert jnp.allclose(out_f32, ref, atol=1e-3, rtol=1e-3), "f32 kernel/reference mismatch"

    # Default performance path: bf16 MXU operands, f32 staging / accumulation / BN / residual.
    out_bf16 = jax.block_until_ready(basic_block_prim(x, w1, g1, b1, w2, g2, b2))
    assert out_bf16.shape == (N, C, H, W)
    assert jnp.allclose(out_bf16, ref, atol=5e-2, rtol=5e-2), "bf16 kernel/reference mismatch"

    print("KERNEL_OK")
</pallas_src>

<mosaic_0001>
module attributes {stable_mosaic.version = 11 : i64} {
  func.func @basic_block_kernel(%arg0: memref<8x512xf32, #tpu.memory_space<vmem>>, %arg1: memref<9x512xf32, #tpu.memory_space<vmem>>, %arg2: memref<8x72xf32, #tpu.memory_space<vmem>>, %arg3: memref<8x1xf32, #tpu.memory_space<vmem>>, %arg4: memref<8x1xf32, #tpu.memory_space<vmem>>, %arg5: memref<8x72xf32, #tpu.memory_space<vmem>>, %arg6: memref<8x1xf32, #tpu.memory_space<vmem>>, %arg7: memref<8x1xf32, #tpu.memory_space<vmem>>, %arg8: memref<8x512xf32, #tpu.memory_space<vmem>>) attributes {dimension_semantics = [], scalar_prefetch = 0 : i64, scratch_operands = 0 : i64, tpu.core_type = #tpu.core_type<tc>} {
    %c0 = arith.constant 0 : index
    %c0_0 = arith.constant 0 : index
    %0 = vector.load %arg0[%c0, %c0_0] : memref<8x512xf32, #tpu.memory_space<vmem>>, vector<8x512xf32>
    %c0_1 = arith.constant 0 : index
    %c0_2 = arith.constant 0 : index
    %1 = vector.load %arg2[%c0_1, %c0_2] : memref<8x72xf32, #tpu.memory_space<vmem>>, vector<8x72xf32>
    %c17_i32 = arith.constant 17 : i32
    %2 = tpu.dynamic_rotate %0 by %c17_i32 dim 1 : vector<8x512xf32>, i32 -> vector<8x512xf32>
    %c0_3 = arith.constant 0 : index
    %c0_4 = arith.constant 0 : index
    %3 = vector.load %arg1[%c0_3, %c0_4] : memref<9x512xf32, #tpu.memory_space<vmem>>, vector<1x512xf32>
    %4 = vector.broadcast %3 : vector<1x512xf32> to vector<8x512xf32>
    %5 = arith.mulf %2, %4 : vector<8x512xf32>
    %c16_i32 = arith.constant 16 : i32
    %6 = tpu.dynamic_rotate %0 by %c16_i32 dim 1 : vector<8x512xf32>, i32 -> vector<8x512xf32>
    %c1 = arith.constant 1 : index
    %c0_5 = arith.constant 0 : index
    %7 = vector.load %arg1[%c1, %c0_5] : memref<9x512xf32, #tpu.memory_space<vmem>>, vector<1x512xf32>
    %8 = vector.broadcast %7 : vector<1x512xf32> to vector<8x512xf32>
    %9 = arith.mulf %6, %8 : vector<8x512xf32>
    %c15_i32 = arith.constant 15 : i32
    %10 = tpu.dynamic_rotate %0 by %c15_i32 dim 1 : vector<8x512xf32>, i32 -> vector<8x512xf32>
    %c2 = arith.constant 2 : index
    %c0_6 = arith.constant 0 : index
    %11 = vector.load %arg1[%c2, %c0_6] : memref<9x512xf32, #tpu.memory_space<vmem>>, vector<1x512xf32>
    %12 = vector.broadcast %11 : vector<1x512xf32> to vector<8x512xf32>
    %13 = arith.mulf %10, %12 : vector<8x512xf32>
    %c1_i32 = arith.constant 1 : i32
    %14 = tpu.dynamic_rotate %0 by %c1_i32 dim 1 : vector<8x512xf32>, i32 -> vector<8x512xf32>
    %c3 = arith.constant 3 : index
    %c0_7 = arith.constant 0 : index
    %15 = vector.load %arg1[%c3, %c0_7] : memref<9x512xf32, #tpu.memory_space<vmem>>, vector<1x512xf32>
    %16 = vector.broadcast %15 : vector<1x512xf32> to vector<8x512xf32>
    %17 = arith.mulf %14, %16 : vector<8x512xf32>
    %c511_i32 = arith.constant 511 : i32
    %18 = tpu.dynamic_rotate %0 by %c511_i32 dim 1 : vector<8x512xf32>, i32 -> vector<8x512xf32>
    %c5 = arith.constant 5 : index
    %c0_8 = arith.constant 0 : index
    %19 = vector.load %arg1[%c5, %c0_8] : memref<9x512xf32, #tpu.memory_space<vmem>>, vector<1x512xf32>
    %20 = vector.broadcast %19 : vector<1x512xf32> to vector<8x512xf32>
    %21 = arith.mulf %18, %20 : vector<8x512xf32>
    %c497_i32 = arith.constant 497 : i32
    %22 = tpu.dynamic_rotate %0 by %c497_i32 dim 1 : vector<8x512xf32>, i32 -> vector<8x512xf32>
    %c6 = arith.constant 6 : index
    %c0_9 = arith.constant 0 : index
    %23 = vector.load %arg1[%c6, %c0_9] : memref<9x512xf32, #tpu.memory_space<vmem>>, vector<1x512xf32>
    %24 = vector.broadcast %23 : vector<1x512xf32> to vector<8x512xf32>
    %25 = arith.mulf %22, %24 : vector<8x512xf32>
    %c496_i32 = arith.constant 496 : i32
    %26 = tpu.dynamic_rotate %0 by %c496_i32 dim 1 : vector<8x512xf32>, i32 -> vector<8x512xf32>
    %c7 = arith.constant 7 : index
    %c0_10 = arith.constant 0 : index
    %27 = vector.load %arg1[%c7, %c0_10] : memref<9x512xf32, #tpu.memory_space<vmem>>, vector<1x512xf32>
    %28 = vector.broadcast %27 : vector<1x512xf32> to vector<8x512xf32>
    %29 = arith.mulf %26, %28 : vector<8x512xf32>
    %c495_i32 = arith.constant 495 : i32
    %30 = tpu.dynamic_rotate %0 by %c495_i32 dim 1 : vector<8x512xf32>, i32 -> vector<8x512xf32>
    %c8 = arith.constant 8 : index
    %c0_11 = arith.constant 0 : index
    %31 = vector.load %arg1[%c8, %c0_11] : memref<9x512xf32, #tpu.memory_space<vmem>>, vector<1x512xf32>
    %32 = vector.broadcast %31 : vector<1x512xf32> to vector<8x512xf32>
    %33 = arith.mulf %30, %32 : vector<8x512xf32>
    %34 = tpu.concatenate %5, %9, %13, %17, %0, %21, %25, %29, %33 in 0 : vector<8x512xf32>, vector<8x512xf32>, vector<8x512xf32>, vector<8x512xf32>, vector<8x512xf32>, vector<8x512xf32>, vector<8x512xf32>, vector<8x512xf32>, vector<8x512xf32> -> vector<72x512xf32>
    %cst = arith.constant dense<0.000000e+00> : vector<8x512xf32>
    %35 = tpu.matmul %1, %34, %cst {dimension_numbers = #tpu.dot_dimension_numbers<[1], [0], [0], [1], [0, 0, 1, 1], [], []>} : vector<8x72xf32>, vector<72x512xf32>, vector<8x512xf32> -> vector<8x512xf32>
    %cst_12 = arith.constant dense<0.000000e+00> : vector<8xf32>
    %36 = vector.multi_reduction <add>, %35, %cst_12 [1] : vector<8x512xf32> to vector<8xf32>
    %37 = vector.shape_cast %36 : vector<8xf32> to vector<8x1xf32>
    %38 = arith.mulf %35, %35 : vector<8x512xf32>
    %cst_13 = arith.constant dense<0.000000e+00> : vector<8xf32>
    %39 = vector.multi_reduction <add>, %38, %cst_13 [1] : vector<8x512xf32> to vector<8xf32>
    %40 = vector.shape_cast %39 : vector<8xf32> to vector<8x1xf32>
    %cst_14 = arith.constant 0.001953125 : f32
    %41 = vector.broadcast %cst_14 : f32 to vector<8x1xf32>
    %42 = arith.mulf %37, %41 : vector<8x1xf32>
    %cst_15 = arith.constant 0.001953125 : f32
    %43 = vector.broadcast %cst_15 : f32 to vector<8x1xf32>
    %44 = arith.mulf %40, %43 : vector<8x1xf32>
    %45 = arith.mulf %42, %42 : vector<8x1xf32>
    %46 = arith.subf %44, %45 : vector<8x1xf32>
    %cst_16 = arith.constant 0.000000e+00 : f32
    %47 = vector.broadcast %cst_16 : f32 to vector<8x1xf32>
    %48 = arith.maximumf %46, %47 : vector<8x1xf32>
    %c0_17 = arith.constant 0 : index
    %c0_18 = arith.constant 0 : index
    %49 = vector.load %arg3[%c0_17, %c0_18] : memref<8x1xf32, #tpu.memory_space<vmem>>, vector<8x1xf32>
    %cst_19 = arith.constant 9.99999974E-6 : f32
    %50 = vector.broadcast %cst_19 : f32 to vector<8x1xf32>
    %51 = arith.addf %48, %50 : vector<8x1xf32>
    %52 = math.rsqrt %51 : vector<8x1xf32>
    %53 = arith.mulf %49, %52 : vector<8x1xf32>
    %c0_20 = arith.constant 0 : index
    %c0_21 = arith.constant 0 : index
    %54 = vector.load %arg4[%c0_20, %c0_21] : memref<8x1xf32, #tpu.memory_space<vmem>>, vector<8x1xf32>
    %55 = arith.mulf %42, %53 : vector<8x1xf32>
    %56 = arith.subf %54, %55 : vector<8x1xf32>
    %57 = vector.broadcast %53 : vector<8x1xf32> to vector<8x512xf32>
    %58 = arith.mulf %35, %57 : vector<8x512xf32>
    %59 = vector.broadcast %56 : vector<8x1xf32> to vector<8x512xf32>
    %60 = arith.addf %58, %59 : vector<8x512xf32>
    %cst_22 = arith.constant 0.000000e+00 : f32
    %61 = vector.broadcast %cst_22 : f32 to vector<8x512xf32>
    %62 = arith.maximumf %60, %61 : vector<8x512xf32>
    %c0_23 = arith.constant 0 : index
    %c0_24 = arith.constant 0 : index
    %63 = vector.load %arg5[%c0_23, %c0_24] : memref<8x72xf32, #tpu.memory_space<vmem>>, vector<8x72xf32>
    %c17_i32_25 = arith.constant 17 : i32
    %64 = tpu.dynamic_rotate %62 by %c17_i32_25 dim 1 : vector<8x512xf32>, i32 -> vector<8x512xf32>
    %c0_26 = arith.constant 0 : index
    %c0_27 = arith.constant 0 : index
    %65 = vector.load %arg1[%c0_26, %c0_27] : memref<9x512xf32, #tpu.memory_space<vmem>>, vector<1x512xf32>
    %66 = vector.broadcast %65 : vector<1x512xf32> to vector<8x512xf32>
    %67 = arith.mulf %64, %66 : vector<8x512xf32>
    %c16_i32_28 = arith.constant 16 : i32
    %68 = tpu.dynamic_rotate %62 by %c16_i32_28 dim 1 : vector<8x512xf32>, i32 -> vector<8x512xf32>
    %c1_29 = arith.constant 1 : index
    %c0_30 = arith.constant 0 : index
    %69 = vector.load %arg1[%c1_29, %c0_30] : memref<9x512xf32, #tpu.memory_space<vmem>>, vector<1x512xf32>
    %70 = vector.broadcast %69 : vector<1x512xf32> to vector<8x512xf32>
    %71 = arith.mulf %68, %70 : vector<8x512xf32>
    %c15_i32_31 = arith.constant 15 : i32
    %72 = tpu.dynamic_rotate %62 by %c15_i32_31 dim 1 : vector<8x512xf32>, i32 -> vector<8x512xf32>
    %c2_32 = arith.constant 2 : index
    %c0_33 = arith.constant 0 : index
    %73 = vector.load %arg1[%c2_32, %c0_33] : memref<9x512xf32, #tpu.memory_space<vmem>>, vector<1x512xf32>
    %74 = vector.broadcast %73 : vector<1x512xf32> to vector<8x512xf32>
    %75 = arith.mulf %72, %74 : vector<8x512xf32>
    %c1_i32_34 = arith.constant 1 : i32
    %76 = tpu.dynamic_rotate %62 by %c1_i32_34 dim 1 : vector<8x512xf32>, i32 -> vector<8x512xf32>
    %c3_35 = arith.constant 3 : index
    %c0_36 = arith.constant 0 : index
    %77 = vector.load %arg1[%c3_35, %c0_36] : memref<9x512xf32, #tpu.memory_space<vmem>>, vector<1x512xf32>
    %78 = vector.broadcast %77 : vector<1x512xf32> to vector<8x512xf32>
    %79 = arith.mulf %76, %78 : vector<8x512xf32>
    %c511_i32_37 = arith.constant 511 : i32
    %80 = tpu.dynamic_rotate %62 by %c511_i32_37 dim 1 : vector<8x512xf32>, i32 -> vector<8x512xf32>
    %c5_38 = arith.constant 5 : index
    %c0_39 = arith.constant 0 : index
    %81 = vector.load %arg1[%c5_38, %c0_39] : memref<9x512xf32, #tpu.memory_space<vmem>>, vector<1x512xf32>
    %82 = vector.broadcast %81 : vector<1x512xf32> to vector<8x512xf32>
    %83 = arith.mulf %80, %82 : vector<8x512xf32>
    %c497_i32_40 = arith.constant 497 : i32
    %84 = tpu.dynamic_rotate %62 by %c497_i32_40 dim 1 : vector<8x512xf32>, i32 -> vector<8x512xf32>
    %c6_41 = arith.constant 6 : index
    %c0_42 = arith.constant 0 : index
    %85 = vector.load %arg1[%c6_41, %c0_42] : memref<9x512xf32, #tpu.memory_space<vmem>>, vector<1x512xf32>
    %86 = vector.broadcast %85 : vector<1x512xf32> to vector<8x512xf32>
    %87 = arith.mulf %84, %86 : vector<8x512xf32>
    %c496_i32_43 = arith.constant 496 : i32
    %88 = tpu.dynamic_rotate %62 by %c496_i32_43 dim 1 : vector<8x512xf32>, i32 -> vector<8x512xf32>
    %c7_44 = arith.constant 7 : index
    %c0_45 = arith.constant 0 : index
    %89 = vector.load %arg1[%c7_44, %c0_45] : memref<9x512xf32, #tpu.memory_space<vmem>>, vector<1x512xf32>
    %90 = vector.broadcast %89 : vector<1x512xf32> to vector<8x512xf32>
    %91 = arith.mulf %88, %90 : vector<8x512xf32>
    %c495_i32_46 = arith.constant 495 : i32
    %92 = tpu.dynamic_rotate %62 by %c495_i32_46 dim 1 : vector<8x512xf32>, i32 -> vector<8x512xf32>
    %c8_47 = arith.constant 8 : index
    %c0_48 = arith.constant 0 : index
    %93 = vector.load %arg1[%c8_47, %c0_48] : memref<9x512xf32, #tpu.memory_space<vmem>>, vector<1x512xf32>
    %94 = vector.broadcast %93 : vector<1x512xf32> to vector<8x512xf32>
    %95 = arith.mulf %92, %94 : vector<8x512xf32>
    %96 = tpu.concatenate %67, %71, %75, %79, %62, %83, %87, %91, %95 in 0 : vector<8x512xf32>, vector<8x512xf32>, vector<8x512xf32>, vector<8x512xf32>, vector<8x512xf32>, vector<8x512xf32>, vector<8x512xf32>, vector<8x512xf32>, vector<8x512xf32> -> vector<72x512xf32>
    %cst_49 = arith.constant dense<0.000000e+00> : vector<8x512xf32>
    %97 = tpu.matmul %63, %96, %cst_49 {dimension_numbers = #tpu.dot_dimension_numbers<[1], [0], [0], [1], [0, 0, 1, 1], [], []>} : vector<8x72xf32>, vector<72x512xf32>, vector<8x512xf32> -> vector<8x512xf32>
    %cst_50 = arith.constant dense<0.000000e+00> : vector<8xf32>
    %98 = vector.multi_reduction <add>, %97, %cst_50 [1] : vector<8x512xf32> to vector<8xf32>
    %99 = vector.shape_cast %98 : vector<8xf32> to vector<8x1xf32>
    %100 = arith.mulf %97, %97 : vector<8x512xf32>
    %cst_51 = arith.constant dense<0.000000e+00> : vector<8xf32>
    %101 = vector.multi_reduction <add>, %100, %cst_51 [1] : vector<8x512xf32> to vector<8xf32>
    %102 = vector.shape_cast %101 : vector<8xf32> to vector<8x1xf32>
    %cst_52 = arith.constant 0.001953125 : f32
    %103 = vector.broadcast %cst_52 : f32 to vector<8x1xf32>
    %104 = arith.mulf %99, %103 : vector<8x1xf32>
    %cst_53 = arith.constant 0.001953125 : f32
    %105 = vector.broadcast %cst_53 : f32 to vector<8x1xf32>
    %106 = arith.mulf %102, %105 : vector<8x1xf32>
    %107 = arith.mulf %104, %104 : vector<8x1xf32>
    %108 = arith.subf %106, %107 : vector<8x1xf32>
    %cst_54 = arith.constant 0.000000e+00 : f32
    %109 = vector.broadcast %cst_54 : f32 to vector<8x1xf32>
    %110 = arith.maximumf %108, %109 : vector<8x1xf32>
    %c0_55 = arith.constant 0 : index
    %c0_56 = arith.constant 0 : index
    %111 = vector.load %arg6[%c0_55, %c0_56] : memref<8x1xf32, #tpu.memory_space<vmem>>, vector<8x1xf32>
    %cst_57 = arith.constant 9.99999974E-6 : f32
    %112 = vector.broadcast %cst_57 : f32 to vector<8x1xf32>
    %113 = arith.addf %110, %112 : vector<8x1xf32>
    %114 = math.rsqrt %113 : vector<8x1xf32>
    %115 = arith.mulf %111, %114 : vector<8x1xf32>
    %c0_58 = arith.constant 0 : index
    %c0_59 = arith.constant 0 : index
    %116 = vector.load %arg7[%c0_58, %c0_59] : memref<8x1xf32, #tpu.memory_space<vmem>>, vector<8x1xf32>
    %117 = arith.mulf %104, %115 : vector<8x1xf32>
    %118 = arith.subf %116, %117 : vector<8x1xf32>
    %119 = vector.broadcast %115 : vector<8x1xf32> to vector<8x512xf32>
    %120 = arith.mulf %97, %119 : vector<8x512xf32>
    %121 = vector.broadcast %118 : vector<8x1xf32> to vector<8x512xf32>
    %122 = arith.addf %120, %121 : vector<8x512xf32>
    %123 = arith.addf %122, %0 : vector<8x512xf32>
    %cst_60 = arith.constant 0.000000e+00 : f32
    %124 = vector.broadcast %cst_60 : f32 to vector<8x512xf32>
    %125 = arith.maximumf %123, %124 : vector<8x512xf32>
    %c0_61 = arith.constant 0 : index
    %c0_62 = arith.constant 0 : index
    %126 = vector.load %arg8[%c0_61, %c0_62] : memref<8x512xf32, #tpu.memory_space<vmem>>, vector<8x512xf32>
    tpu.vector_store %arg8[%c0_61, %c0_62], %125 {strides = array<i32>} : memref<8x512xf32, #tpu.memory_space<vmem>>, vector<8x512xf32>,
    return
  }
}

</mosaic_0001>

<llo_original>
// kernel: basic_block_prim.1
$region0: #{basic_block_prim.1}
  #allocation0 [shape = 'u32[]', space=smem, size = 0x4, offset = 0x4, fixed_abs, tag = 'smem constant byte address 0x4 - core index']
  #allocation1 [shape = 'u32[72,128]{1,0:T(1,128)}', space=vmem, size = 0x9000, scoped, tag = 'internal scratch']
  %s0 = inlined_call_operand.vmem [shape: f32[8,512], index: 0, kind: input, shape index: {}]
  %s1 = inlined_call_operand.vmem [shape: f32[9,512], index: 1, kind: input, shape index: {}]
  %s2 = inlined_call_operand.vmem [shape: f32[8,72], index: 2, kind: input, shape index: {}]
  %s3 = inlined_call_operand.vmem [shape: f32[8,1], index: 3, kind: input, shape index: {}]
  %s4 = inlined_call_operand.vmem [shape: f32[8,1], index: 4, kind: input, shape index: {}]
  %s5 = inlined_call_operand.vmem [shape: f32[8,72], index: 5, kind: input, shape index: {}]
  %s6 = inlined_call_operand.vmem [shape: f32[8,1], index: 6, kind: input, shape index: {}]
  %s7 = inlined_call_operand.vmem [shape: f32[8,1], index: 7, kind: input, shape index: {}]
  %s8 = inlined_call_operand.vmem [shape: f32[8,512], index: 8, kind: output, shape index: {}]
  %s9 = sld [smem:[#allocation0]]
  $region42: #{basic_block_prim.1} parent=0
    _
  %s11 = ssub.s32 1, %s9
  %s12 = scalar_select 0, %s11, %s9
  // Predicated region
  $region2: #{basic_block_prim.1} parent=0 // pred_check
    _
  $region3: #{basic_block_prim.1} parent=0 // pred_check_branch
    %14 = sbr.rel (0) target = $region5
  $region4: #{basic_block_prim.1} parent=0 // pred_region
    _
  $region5: #{basic_block_prim.1} parent=0 // pred_fallthru
    _
  // Predicated region
  $region6: #{basic_block_prim.1} parent=0 // pred_check
    _
  $region7: #{basic_block_prim.1} parent=0 // pred_check_branch
    %16 = sbr.rel (0) target = $region9
  $region8: #{basic_block_prim.1} parent=0 // pred_region
    _
  $region9: #{basic_block_prim.1} parent=0 // pred_fallthru
    _
  // Predicated region
  $region10: #{basic_block_prim.1} parent=0 // pred_check
    _
  $region11: #{basic_block_prim.1} parent=0 // pred_check_branch
    %18 = sbr.rel (0) target = $region13
  $region12: #{basic_block_prim.1} parent=0 // pred_region
    _
  $region13: #{basic_block_prim.1} parent=0 // pred_fallthru
    _
  // Predicated region
  $region14: #{basic_block_prim.1} parent=0 // pred_check
    _
  $region15: #{basic_block_prim.1} parent=0 // pred_check_branch
    %20 = sbr.rel (0) target = $region17
  $region16: #{basic_block_prim.1} parent=0 // pred_region
    _
  $region17: #{basic_block_prim.1} parent=0 // pred_fallthru
    _
  // Predicated region
  $region18: #{basic_block_prim.1} parent=0 // pred_check
    _
  $region19: #{basic_block_prim.1} parent=0 // pred_check_branch
    %22 = sbr.rel (0) target = $region21
  $region20: #{basic_block_prim.1} parent=0 // pred_region
    _
  $region21: #{basic_block_prim.1} parent=0 // pred_fallthru
    _
  // Predicated region
  $region22: #{basic_block_prim.1} parent=0 // pred_check
    _
  $region23: #{basic_block_prim.1} parent=0 // pred_check_branch
    %24 = sbr.rel (0) target = $region25
  $region24: #{basic_block_prim.1} parent=0 // pred_region
    _
  $region25: #{basic_block_prim.1} parent=0 // pred_fallthru
    _
  // Predicated region
  $region26: #{basic_block_prim.1} parent=0 // pred_check
    _
  $region27: #{basic_block_prim.1} parent=0 // pred_check_branch
    %26 = sbr.rel (0) target = $region29
  $region28: #{basic_block_prim.1} parent=0 // pred_region
    _
  $region29: #{basic_block_prim.1} parent=0 // pred_fallthru
    _
  // Predicated region
  $region30: #{basic_block_prim.1} parent=0 // pred_check
    _
  $region31: #{basic_block_prim.1} parent=0 // pred_check_branch
    %28 = sbr.rel (0) target = $region33
  $region32: #{basic_block_prim.1} parent=0 // pred_region
    _
  $region33: #{basic_block_prim.1} parent=0 // pred_fallthru
    _
  %v29 = vld [vmem:[%s0] sm:$0xff]
  %v30 = vld [vmem:[%s0 + $0x8] sm:$0xff]
  %v31 = vld [vmem:[%s0 + $0x10] sm:$0xff]
  %v32 = vld [vmem:[%s0 + $0x18] sm:$0xff]
  %v33 = vld [vmem:[%s2] sm:$0xff]
  %34 = vrot.lane.b32.xlu0 %v29, 17
  %v35 = vpop.permute.xlu0 %34
  %36 = vrot.lane.b32.xlu0 %v30, 17
  %v37 = vpop.permute.xlu0 %36
  %38 = vrot.lane.b32.xlu0 %v31, 17
  %v39 = vpop.permute.xlu0 %38
  %40 = vrot.lane.b32.xlu0 %v32, 17
  %v41 = vpop.permute.xlu0 %40
  %v42 = vlaneseq
  %v43 = vand.u32 %v42, 127
  %vm44 = vcmp.lt.s32.totalorder %v43, 17
  %v45 = vsel %vm44, %v39, %v41
  %v46 = vsel %vm44, %v37, %v39
  %v47 = vsel %vm44, %v35, %v37
  %v48 = vsel %vm44, %v41, %v35
  %v49 = vld [vmem:[%s1] ss:$8 sm:$0xf]
  %v51 = vperm.slane %v49, 0
  %v52 = vperm.slane %v49, 1
  %v53 = vperm.slane %v49, 2
  %v54 = vperm.slane %v49, 3
  %v59 = vmul.f32 %v48, %v51
  %v60 = vmul.f32 %v47, %v52
  %v61 = vmul.f32 %v46, %v53
  %v62 = vmul.f32 %v45, %v54
  %63 = vrot.lane.b32.xlu0 %v29, 16
  %v64 = vpop.permute.xlu0 %63
  %65 = vrot.lane.b32.xlu0 %v30, 16
  %v66 = vpop.permute.xlu0 %65
  %67 = vrot.lane.b32.xlu0 %v31, 16
  %v68 = vpop.permute.xlu0 %67
  %69 = vrot.lane.b32.xlu0 %v32, 16
  %v70 = vpop.permute.xlu0 %69
  %vm71 = vcmp.lt.s32.totalorder %v43, 16
  %v72 = vsel %vm71, %v68, %v70
  %v73 = vsel %vm71, %v66, %v68
  %v74 = vsel %vm71, %v64, %v66
  %v75 = vsel %vm71, %v70, %v64
  %s76 = scalar_lea.vmem %s1, 1
  %v77 = vld [vmem:[%s76] ss:$8 sm:$0xf]
  %v79 = vperm.slane %v77, 0
  %v80 = vperm.slane %v77, 1
  %v81 = vperm.slane %v77, 2
  %v82 = vperm.slane %v77, 3
  %v87 = vmul.f32 %v75, %v79
  %v88 = vmul.f32 %v74, %v80
  %v89 = vmul.f32 %v73, %v81
  %v90 = vmul.f32 %v72, %v82
  %91 = vrot.lane.b32.xlu0 %v29, 15
  %v92 = vpop.permute.xlu0 %91
  %93 = vrot.lane.b32.xlu0 %v30, 15
  %v94 = vpop.permute.xlu0 %93
  %95 = vrot.lane.b32.xlu0 %v31, 15
  %v96 = vpop.permute.xlu0 %95
  %97 = vrot.lane.b32.xlu0 %v32, 15
  %v98 = vpop.permute.xlu0 %97
  %vm99 = vcmp.lt.s32.totalorder %v43, 15
  %v100 = vsel %vm99, %v96, %v98
  %v101 = vsel %vm99, %v94, %v96
  %v102 = vsel %vm99, %v92, %v94
  %v103 = vsel %vm99, %v98, %v92
  %s104 = scalar_lea.vmem %s1, 2
  %v105 = vld [vmem:[%s104] ss:$8 sm:$0xf]
  %v107 = vperm.slane %v105, 0
  %v108 = vperm.slane %v105, 1
  %v109 = vperm.slane %v105, 2
  %v110 = vperm.slane %v105, 3
  %v115 = vmul.f32 %v103, %v107
  %v116 = vmul.f32 %v102, %v108
  %v117 = vmul.f32 %v101, %v109
  %v118 = vmul.f32 %v100, %v110
  %119 = vrot.lane.b32.xlu0 %v29, 1
  %v120 = vpop.permute.xlu0 %119
  %121 = vrot.lane.b32.xlu0 %v30, 1
  %v122 = vpop.permute.xlu0 %121
  %123 = vrot.lane.b32.xlu0 %v31, 1
  %v124 = vpop.permute.xlu0 %123
  %125 = vrot.lane.b32.xlu0 %v32, 1
  %v126 = vpop.permute.xlu0 %125
  %vm127 = vcmp.lt.s32.totalorder %v43, 1
  %v128 = vsel %vm127, %v124, %v126
  %v129 = vsel %vm127, %v122, %v124
  %v130 = vsel %vm127, %v120, %v122
  %v131 = vsel %vm127, %v126, %v120
  %s132 = scalar_lea.vmem %s1, 3
  %v133 = vld [vmem:[%s132] ss:$8 sm:$0xf]
  %v135 = vperm.slane %v133, 0
  %v136 = vperm.slane %v133, 1
  %v137 = vperm.slane %v133, 2
  %v138 = vperm.slane %v133, 3
  %v143 = vmul.f32 %v131, %v135
  %v144 = vmul.f32 %v130, %v136
  %v145 = vmul.f32 %v129, %v137
  %v146 = vmul.f32 %v128, %v138
  %147 = vrot.lane.b32.xlu0 %v29, 127
  %v148 = vpop.permute.xlu0 %147
  %149 = vrot.lane.b32.xlu0 %v30, 127
  %v150 = vpop.permute.xlu0 %149
  %151 = vrot.lane.b32.xlu0 %v31, 127
  %v152 = vpop.permute.xlu0 %151
  %153 = vrot.lane.b32.xlu0 %v32, 127
  %v154 = vpop.permute.xlu0 %153
  %vm155 = vcmp.lt.s32.totalorder %v43, 127
  %v156 = vsel %vm155, %v152, %v154
  %v157 = vsel %vm155, %v150, %v152
  %v158 = vsel %vm155, %v148, %v150
  %v159 = vsel %vm155, %v154, %v148
  %s160 = scalar_lea.vmem %s1, 5
  %v161 = vld [vmem:[%s160] ss:$8 sm:$0xf]
  %v163 = vperm.slane %v161, 0
  %v164 = vperm.slane %v161, 1
  %v165 = vperm.slane %v161, 2
  %v166 = vperm.slane %v161, 3
  %v171 = vmul.f32 %v158, %v163
  %v172 = vmul.f32 %v157, %v164
  %v173 = vmul.f32 %v156, %v165
  %v174 = vmul.f32 %v159, %v166
  %175 = vrot.lane.b32.xlu0 %v29, 113
  %v176 = vpop.permute.xlu0 %175
  %177 = vrot.lane.b32.xlu0 %v30, 113
  %v178 = vpop.permute.xlu0 %177
  %179 = vrot.lane.b32.xlu0 %v31, 113
  %v180 = vpop.permute.xlu0 %179
  %181 = vrot.lane.b32.xlu0 %v32, 113
  %v182 = vpop.permute.xlu0 %181
  %vm183 = vcmp.lt.s32.totalorder %v43, 113
  %v184 = vsel %vm183, %v180, %v182
  %v185 = vsel %vm183, %v178, %v180
  %v186 = vsel %vm183, %v176, %v178
  %v187 = vsel %vm183, %v182, %v176
  %s188 = scalar_lea.vmem %s1, 6
  %v189 = vld [vmem:[%s188] ss:$8 sm:$0xf]
  %v191 = vperm.slane %v189, 0
  %v192 = vperm.slane %v189, 1
  %v193 = vperm.slane %v189, 2
  %v194 = vperm.slane %v189, 3
  %v199 = vmul.f32 %v186, %v191
  %v200 = vmul.f32 %v185, %v192
  %v201 = vmul.f32 %v184, %v193
  %v202 = vmul.f32 %v187, %v194
  %203 = vrot.lane.b32.xlu0 %v29, 112
  %v204 = vpop.permute.xlu0 %203
  %205 = vrot.lane.b32.xlu0 %v30, 112
  %v206 = vpop.permute.xlu0 %205
  %207 = vrot.lane.b32.xlu0 %v31, 112
  %v208 = vpop.permute.xlu0 %207
  %209 = vrot.lane.b32.xlu0 %v32, 112
  %v210 = vpop.permute.xlu0 %209
  %vm211 = vcmp.lt.s32.totalorder %v43, 112
  %v212 = vsel %vm211, %v208, %v210
  %v213 = vsel %vm211, %v206, %v208
  %v214 = vsel %vm211, %v204, %v206
  %v215 = vsel %vm211, %v210, %v204
  %s216 = scalar_lea.vmem %s1, 7
  %v217 = vld [vmem:[%s216] ss:$8 sm:$0xf]
  %v219 = vperm.slane %v217, 0
  %v220 = vperm.slane %v217, 1
  %v221 = vperm.slane %v217, 2
  %v222 = vperm.slane %v217, 3
  %v227 = vmul.f32 %v214, %v219
  %v228 = vmul.f32 %v213, %v220
  %v229 = vmul.f32 %v212, %v221
  %v230 = vmul.f32 %v215, %v222
  %231 = vrot.lane.b32.xlu0 %v29, 111
  %v232 = vpop.permute.xlu0 %231
  %233 = vrot.lane.b32.xlu0 %v30, 111
  %v234 = vpop.permute.xlu0 %233
  %235 = vrot.lane.b32.xlu0 %v31, 111
  %v236 = vpop.permute.xlu0 %235
  %237 = vrot.lane.b32.xlu0 %v32, 111
  %v238 = vpop.permute.xlu0 %237
  %vm239 = vcmp.lt.s32.totalorder %v43, 111
  %v240 = vsel %vm239, %v236, %v238
  %v241 = vsel %vm239, %v234, %v236
  %v242 = vsel %vm239, %v232, %v234
  %v243 = vsel %vm239, %v238, %v232
  %s244 = scalar_lea.vmem %s1, 32
  %v245 = vld [vmem:[%s244] ss:$8 sm:$0xf]
  %v247 = vperm.slane %v245, 0
  %v248 = vperm.slane %v245, 1
  %v249 = vperm.slane %v245, 2
  %v250 = vperm.slane %v245, 3
  %v255 = vmul.f32 %v242, %v247
  %v256 = vmul.f32 %v241, %v248
  %v257 = vmul.f32 %v240, %v249
  %v258 = vmul.f32 %v243, %v250
  %vm259 = vcmask 588800
  %v261 = vsel %vm259, %v33, 0
  %263 = vmatpush.msra.mxu0 0.0
  %264 = vmatpush.msra.mxu0 0.0
  %265 = vmatpush.msra.mxu0 0.0
  %266 = vmatpush.msra.mxu0 0.0
  %267 = vmatpush.msra.mxu0 0.0
  %268 = vmatpush.msra.mxu0 0.0
  %269 = vmatpush.msra.mxu0 0.0
  %270 = vmatpush.msra.mxu0 %v255
  %271 = vmatpush.msra.mxu0 %v227
  %272 = vmatpush.msra.mxu0 %v199
  %273 = vmatpush.msra.mxu0 %v171
  %274 = vmatpush.msra.mxu0 %v29
  %275 = vmatpush.msra.mxu0 %v143
  %276 = vmatpush.msra.mxu0 %v115
  %277 = vmatpush.msra.mxu0 %v87
  %278 = vmatpush.msra.mxu0 %v59
  %279 = vmatmul.f32.gmra.mxu0 %v261
  %v280 = vpop.f32.mrf.mxu0
  %v281 = vadd.f32 0.0, %v280
  %282 = vdwg.mxu0
  %283 = vmatpush.msra.mxu0 0.0
  %284 = vmatpush.msra.mxu0 0.0
  %285 = vmatpush.msra.mxu0 0.0
  %286 = vmatpush.msra.mxu0 0.0
  %287 = vmatpush.msra.mxu0 0.0
  %288 = vmatpush.msra.mxu0 0.0
  %289 = vmatpush.msra.mxu0 0.0
  %290 = vmatpush.msra.mxu0 %v256
  %291 = vmatpush.msra.mxu0 %v228
  %292 = vmatpush.msra.mxu0 %v200
  %293 = vmatpush.msra.mxu0 %v172
  %294 = vmatpush.msra.mxu0 %v30
  %295 = vmatpush.msra.mxu0 %v144
  %296 = vmatpush.msra.mxu0 %v116
  %297 = vmatpush.msra.mxu0 %v88
  %298 = vmatpush.msra.mxu0 %v60
  %299 = vmatmul.f32.gmra.mxu0 %v261
  %v300 = vpop.f32.mrf.mxu0
  %v301 = vadd.f32 0.0, %v300
  %302 = vdwg.mxu0
  %303 = vmatpush.msra.mxu0 0.0
  %304 = vmatpush.msra.mxu0 0.0
  %305 = vmatpush.msra.mxu0 0.0
  %306 = vmatpush.msra.mxu0 0.0
  %307 = vmatpush.msra.mxu0 0.0
  %308 = vmatpush.msra.mxu0 0.0
  %309 = vmatpush.msra.mxu0 0.0
  %310 = vmatpush.msra.mxu0 %v257
  %311 = vmatpush.msra.mxu0 %v229
  %312 = vmatpush.msra.mxu0 %v201
  %313 = vmatpush.msra.mxu0 %v173
  %314 = vmatpush.msra.mxu0 %v31
  %315 = vmatpush.msra.mxu0 %v145
  %316 = vmatpush.msra.mxu0 %v117
  %317 = vmatpush.msra.mxu0 %v89
  %318 = vmatpush.msra.mxu0 %v61
  %319 = vmatmul.f32.gmra.mxu0 %v261
  %v320 = vpop.f32.mrf.mxu0
  %v321 = vadd.f32 0.0, %v320
  %322 = vdwg.mxu0
  %323 = vmatpush.msra.mxu0 0.0
  %324 = vmatpush.msra.mxu0 0.0
  %325 = vmatpush.msra.mxu0 0.0
  %326 = vmatpush.msra.mxu0 0.0
  %327 = vmatpush.msra.mxu0 0.0
  %328 = vmatpush.msra.mxu0 0.0
  %329 = vmatpush.msra.mxu0 0.0
  %330 = vmatpush.msra.mxu0 %v258
  %331 = vmatpush.msra.mxu0 %v230
  %332 = vmatpush.msra.mxu0 %v202
  %333 = vmatpush.msra.mxu0 %v174
  %334 = vmatpush.msra.mxu0 %v32
  %335 = vmatpush.msra.mxu0 %v146
  %336 = vmatpush.msra.mxu0 %v118
  %337 = vmatpush.msra.mxu0 %v90
  %338 = vmatpush.msra.mxu0 %v62
  %339 = vmatmul.f32.gmra.mxu0 %v261
  %v340 = vpop.f32.mrf.mxu0
  %v341 = vadd.f32 0.0, %v340
  %342 = vdwg.mxu0
  %v343 = vadd.f32 %v281, %v301
  %v344 = vadd.f32 %v343, %v321
  %v345 = vadd.f32 %v344, %v341
  %346 = vadd.xlane.f32.xlu0 %v345
  %v347 = vpop.xlane.xlu0 %346
  %v348 = vmul.f32 %v281, %v281
  %v349 = vmul.f32 %v301, %v301
  %v350 = vmul.f32 %v321, %v321
  %v351 = vmul.f32 %v341, %v341
  %v352 = vadd.f32 %v348, %v349
  %v353 = vadd.f32 %v352, %v350
  %v354 = vadd.f32 %v353, %v351
  %355 = vadd.xlane.f32.xlu0 %v354
  %v356 = vpop.xlane.xlu0 %355
  %v357 = vmul.f32 %v347, 0.001953125
  %v358 = vmul.f32 %v356, 0.001953125
  %v359 = vmul.f32 %v357, %v357
  %v360 = vsub.f32 %v358, %v359
  %v361 = vmax.f32 %v360, 0.0
  %v362 = vld [vmem:[%s3] sm:$0xff]
  %v363 = vadd.f32 %v361, 1e-05
  %v364 = vrsqrt.pop %v363
  %v365 = vmul.f32 %v364, %v363
  %v366 = vmul.f32 %v365, %v364
  %v367 = vmul.f32 0.5, %v366
  %v368 = vsub.f32 1.5, %v367
  %v369 = vmul.f32 %v364, %v368
  %vm370 = vweird.f32 %v363
  %vm371 = vweird.f32 %v364
  %vm372 = vmor %vm370, %vm371
  %v373 = vsel %vm372, %v364, %v369
  %v374 = vmul.f32 %v362, %v373
  %v375 = vld [vmem:[%s4] sm:$0xff]
  %v376 = vmul.f32 %v357, %v374
  %v377 = vsub.f32 %v375, %v376
  %379 = vset.pattern.permute.xlu0 0
  %380 = vperm.xlu0 %379, %v374
  %v381 = vpop.permute.xlu0 %380
  %v383 = vmul.f32 %v281, %v381
  %v384 = vmul.f32 %v301, %v381
  %v385 = vmul.f32 %v321, %v381
  %v386 = vmul.f32 %v341, %v381
  %388 = vset.pattern.permute.xlu0 0
  %389 = vperm.xlu0 %388, %v377
  %v390 = vpop.permute.xlu0 %389
  %v392 = vadd.f32 %v383, %v390
  %v393 = vadd.f32 %v384, %v390
  %v394 = vadd.f32 %v385, %v390
  %v395 = vadd.f32 %v386, %v390
  %v396 = vmax.f32 %v392, 0.0
  %v397 = vmax.f32 %v393, 0.0
  %v398 = vmax.f32 %v394, 0.0
  %v399 = vmax.f32 %v395, 0.0
  %v400 = vld [vmem:[%s5] sm:$0xff]
  %401 = vrot.lane.b32.xlu0 %v396, 17
  %v402 = vpop.permute.xlu0 %401
  %403 = vrot.lane.b32.xlu0 %v397, 17
  %v404 = vpop.permute.xlu0 %403
  %405 = vrot.lane.b32.xlu0 %v398, 17
  %v406 = vpop.permute.xlu0 %405
  %407 = vrot.lane.b32.xlu0 %v399, 17
  %v408 = vpop.permute.xlu0 %407
  %v409 = vsel %vm44, %v406, %v408
  %v410 = vsel %vm44, %v404, %v406
  %v411 = vsel %vm44, %v402, %v404
  %v412 = vsel %vm44, %v408, %v402
  %v413 = vmul.f32 %v412, %v51
  %v414 = vmul.f32 %v411, %v52
  %v415 = vmul.f32 %v410, %v53
  %v416 = vmul.f32 %v409, %v54
  %417 = vrot.lane.b32.xlu0 %v396, 16
  %v418 = vpop.permute.xlu0 %417
  %419 = vrot.lane.b32.xlu0 %v397, 16
  %v420 = vpop.permute.xlu0 %419
  %421 = vrot.lane.b32.xlu0 %v398, 16
  %v422 = vpop.permute.xlu0 %421
  %423 = vrot.lane.b32.xlu0 %v399, 16
  %v424 = vpop.permute.xlu0 %423
  %v425 = vsel %vm71, %v422, %v424
  %v426 = vsel %vm71, %v420, %v422
  %v427 = vsel %vm71, %v418, %v420
  %v428 = vsel %vm71, %v424, %v418
  %v429 = vmul.f32 %v428, %v79
  %v430 = vmul.f32 %v427, %v80
  %v431 = vmul.f32 %v426, %v81
  %v432 = vmul.f32 %v425, %v82
  %433 = vrot.lane.b32.xlu0 %v396, 15
  %v434 = vpop.permute.xlu0 %433
  %435 = vrot.lane.b32.xlu0 %v397, 15
  %v436 = vpop.permute.xlu0 %435
  %437 = vrot.lane.b32.xlu0 %v398, 15
  %v438 = vpop.permute.xlu0 %437
  %439 = vrot.lane.b32.xlu0 %v399, 15
  %v440 = vpop.permute.xlu0 %439
  %v441 = vsel %vm99, %v438, %v440
  %v442 = vsel %vm99, %v436, %v438
  %v443 = vsel %vm99, %v434, %v436
  %v444 = vsel %vm99, %v440, %v434
  %v445 = vmul.f32 %v444, %v107
  %v446 = vmul.f32 %v443, %v108
  %v447 = vmul.f32 %v442, %v109
  %v448 = vmul.f32 %v441, %v110
  %449 = vrot.lane.b32.xlu0 %v396, 1
  %v450 = vpop.permute.xlu0 %449
  %451 = vrot.lane.b32.xlu0 %v397, 1
  %v452 = vpop.permute.xlu0 %451
  %453 = vrot.lane.b32.xlu0 %v398, 1
  %v454 = vpop.permute.xlu0 %453
  %455 = vrot.lane.b32.xlu0 %v399, 1
  %v456 = vpop.permute.xlu0 %455
  %v457 = vsel %vm127, %v454, %v456
  %v458 = vsel %vm127, %v452, %v454
  %v459 = vsel %vm127, %v450, %v452
  %v460 = vsel %vm127, %v456, %v450
  %v461 = vmul.f32 %v460, %v135
  %v462 = vmul.f32 %v459, %v136
  %v463 = vmul.f32 %v458, %v137
  %v464 = vmul.f32 %v457, %v138
  %465 = vrot.lane.b32.xlu0 %v396, 127
  %v466 = vpop.permute.xlu0 %465
  %467 = vrot.lane.b32.xlu0 %v397, 127
  %v468 = vpop.permute.xlu0 %467
  %469 = vrot.lane.b32.xlu0 %v398, 127
  %v470 = vpop.permute.xlu0 %469
  %471 = vrot.lane.b32.xlu0 %v399, 127
  %v472 = vpop.permute.xlu0 %471
  %v473 = vsel %vm155, %v470, %v472
  %v474 = vsel %vm155, %v468, %v470
  %v475 = vsel %vm155, %v466, %v468
  %v476 = vsel %vm155, %v472, %v466
  %v477 = vmul.f32 %v475, %v163
  %v478 = vmul.f32 %v474, %v164
  %v479 = vmul.f32 %v473, %v165
  %v480 = vmul.f32 %v476, %v166
  %481 = vrot.lane.b32.xlu0 %v396, 113
  %v482 = vpop.permute.xlu0 %481
  %483 = vrot.lane.b32.xlu0 %v397, 113
  %v484 = vpop.permute.xlu0 %483
  %485 = vrot.lane.b32.xlu0 %v398, 113
  %v486 = vpop.permute.xlu0 %485
  %487 = vrot.lane.b32.xlu0 %v399, 113
  %v488 = vpop.permute.xlu0 %487
  %v489 = vsel %vm183, %v486, %v488
  %v490 = vsel %vm183, %v484, %v486
  %v491 = vsel %vm183, %v482, %v484
  %v492 = vsel %vm183, %v488, %v482
  %v493 = vmul.f32 %v491, %v191
  %v494 = vmul.f32 %v490, %v192
  %v495 = vmul.f32 %v489, %v193
  %v496 = vmul.f32 %v492, %v194
  %497 = vrot.lane.b32.xlu0 %v396, 112
  %v498 = vpop.permute.xlu0 %497
  %499 = vrot.lane.b32.xlu0 %v397, 112
  %v500 = vpop.permute.xlu0 %499
  %501 = vrot.lane.b32.xlu0 %v398, 112
  %v502 = vpop.permute.xlu0 %501
  %503 = vrot.lane.b32.xlu0 %v399, 112
  %v504 = vpop.permute.xlu0 %503
  %v505 = vsel %vm211, %v502, %v504
  %v506 = vsel %vm211, %v500, %v502
  %v507 = vsel %vm211, %v498, %v500
  %v508 = vsel %vm211, %v504, %v498
  %v509 = vmul.f32 %v507, %v219
  %v510 = vmul.f32 %v506, %v220
  %v511 = vmul.f32 %v505, %v221
  %v512 = vmul.f32 %v508, %v222
  %513 = vrot.lane.b32.xlu0 %v396, 111
  %v514 = vpop.permute.xlu0 %513
  %515 = vrot.lane.b32.xlu0 %v397, 111
  %v516 = vpop.permute.xlu0 %515
  %517 = vrot.lane.b32.xlu0 %v398, 111
  %v518 = vpop.permute.xlu0 %517
  %519 = vrot.lane.b32.xlu0 %v399, 111
  %v520 = vpop.permute.xlu0 %519
  %v521 = vsel %vm239, %v518, %v520
  %v522 = vsel %vm239, %v516, %v518
  %v523 = vsel %vm239, %v514, %v516
  %v524 = vsel %vm239, %v520, %v514
  %v525 = vmul.f32 %v523, %v247
  %v526 = vmul.f32 %v522, %v248
  %v527 = vmul.f32 %v521, %v249
  %v528 = vmul.f32 %v524, %v250
  %v530 = vsel %vm259, %v400, 0
  %532 = vmatpush.msra.mxu0 0.0
  %533 = vmatpush.msra.mxu0 0.0
  %534 = vmatpush.msra.mxu0 0.0
  %535 = vmatpush.msra.mxu0 0.0
  %536 = vmatpush.msra.mxu0 0.0
  %537 = vmatpush.msra.mxu0 0.0
  %538 = vmatpush.msra.mxu0 0.0
  %539 = vmatpush.msra.mxu0 %v525
  %540 = vmatpush.msra.mxu0 %v509
  %541 = vmatpush.msra.mxu0 %v493
  %542 = vmatpush.msra.mxu0 %v477
  %543 = vmatpush.msra.mxu0 %v396
  %544 = vmatpush.msra.mxu0 %v461
  %545 = vmatpush.msra.mxu0 %v445
  %546 = vmatpush.msra.mxu0 %v429
  %547 = vmatpush.msra.mxu0 %v413
  %548 = vmatmul.f32.gmra.mxu0 %v530
  %v549 = vpop.f32.mrf.mxu0
  %v550 = vadd.f32 0.0, %v549
  %551 = vdwg.mxu0
  %552 = vmatpush.msra.mxu0 0.0
  %553 = vmatpush.msra.mxu0 0.0
  %554 = vmatpush.msra.mxu0 0.0
  %555 = vmatpush.msra.mxu0 0.0
  %556 = vmatpush.msra.mxu0 0.0
  %557 = vmatpush.msra.mxu0 0.0
  %558 = vmatpush.msra.mxu0 0.0
  %559 = vmatpush.msra.mxu0 %v526
  %560 = vmatpush.msra.mxu0 %v510
  %561 = vmatpush.msra.mxu0 %v494
  %562 = vmatpush.msra.mxu0 %v478
  %563 = vmatpush.msra.mxu0 %v397
  %564 = vmatpush.msra.mxu0 %v462
  %565 = vmatpush.msra.mxu0 %v446
  %566 = vmatpush.msra.mxu0 %v430
  %567 = vmatpush.msra.mxu0 %v414
  %568 = vmatmul.f32.gmra.mxu0 %v530
  %v569 = vpop.f32.mrf.mxu0
  %v570 = vadd.f32 0.0, %v569
  %571 = vdwg.mxu0
  %572 = vmatpush.msra.mxu0 0.0
  %573 = vmatpush.msra.mxu0 0.0
  %574 = vmatpush.msra.mxu0 0.0
  %575 = vmatpush.msra.mxu0 0.0
  %576 = vmatpush.msra.mxu0 0.0
  %577 = vmatpush.msra.mxu0 0.0
  %578 = vmatpush.msra.mxu0 0.0
  %579 = vmatpush.msra.mxu0 %v527
  %580 = vmatpush.msra.mxu0 %v511
  %581 = vmatpush.msra.mxu0 %v495
  %582 = vmatpush.msra.mxu0 %v479
  %583 = vmatpush.msra.mxu0 %v398
  %584 = vmatpush.msra.mxu0 %v463
  %585 = vmatpush.msra.mxu0 %v447
  %586 = vmatpush.msra.mxu0 %v431
  %587 = vmatpush.msra.mxu0 %v415
  %588 = vmatmul.f32.gmra.mxu0 %v530
  %v589 = vpop.f32.mrf.mxu0
  %v590 = vadd.f32 0.0, %v589
  %591 = vdwg.mxu0
  %592 = vmatpush.msra.mxu0 0.0
  %593 = vmatpush.msra.mxu0 0.0
  %594 = vmatpush.msra.mxu0 0.0
  %595 = vmatpush.msra.mxu0 0.0
  %596 = vmatpush.msra.mxu0 0.0
  %597 = vmatpush.msra.mxu0 0.0
  %598 = vmatpush.msra.mxu0 0.0
  %599 = vmatpush.msra.mxu0 %v528
  %600 = vmatpush.msra.mxu0 %v512
  %601 = vmatpush.msra.mxu0 %v496
  %602 = vmatpush.msra.mxu0 %v480
  %603 = vmatpush.msra.mxu0 %v399
  %604 = vmatpush.msra.mxu0 %v464
  %605 = vmatpush.msra.mxu0 %v448
  %606 = vmatpush.msra.mxu0 %v432
  %607 = vmatpush.msra.mxu0 %v416
  %608 = vmatmul.f32.gmra.mxu0 %v530
  %v609 = vpop.f32.mrf.mxu0
  %v610 = vadd.f32 0.0, %v609
  %611 = vdwg.mxu0
  %v612 = vadd.f32 %v550, %v570
  %v613 = vadd.f32 %v612, %v590
  %v614 = vadd.f32 %v613, %v610
  %615 = vadd.xlane.f32.xlu0 %v614
  %v616 = vpop.xlane.xlu0 %615
  %v617 = vmul.f32 %v550, %v550
  %v618 = vmul.f32 %v570, %v570
  %v619 = vmul.f32 %v590, %v590
  %v620 = vmul.f32 %v610, %v610
  %v621 = vadd.f32 %v617, %v618
  %v622 = vadd.f32 %v621, %v619
  %v623 = vadd.f32 %v622, %v620
  %624 = vadd.xlane.f32.xlu0 %v623
  %v625 = vpop.xlane.xlu0 %624
  %v626 = vmul.f32 %v616, 0.001953125
  %v627 = vmul.f32 %v625, 0.001953125
  %v628 = vmul.f32 %v626, %v626
  %v629 = vsub.f32 %v627, %v628
  %v630 = vmax.f32 %v629, 0.0
  %v631 = vld [vmem:[%s6] sm:$0xff]
  %v632 = vadd.f32 %v630, 1e-05
  %v633 = vrsqrt.pop %v632
  %v634 = vmul.f32 %v633, %v632
  %v635 = vmul.f32 %v634, %v633
  %v636 = vmul.f32 0.5, %v635
  %v637 = vsub.f32 1.5, %v636
  %v638 = vmul.f32 %v633, %v637
  %vm639 = vweird.f32 %v632
  %vm640 = vweird.f32 %v633
  %vm641 = vmor %vm639, %vm640
  %v642 = vsel %vm641, %v633, %v638
  %v643 = vmul.f32 %v631, %v642
  %v644 = vld [vmem:[%s7] sm:$0xff]
  %v645 = vmul.f32 %v626, %v643
  %v646 = vsub.f32 %v644, %v645
  %648 = vset.pattern.permute.xlu0 0
  %649 = vperm.xlu0 %648, %v643
  %v650 = vpop.permute.xlu0 %649
  %v652 = vmul.f32 %v550, %v650
  %v653 = vmul.f32 %v570, %v650
  %v654 = vmul.f32 %v590, %v650
  %v655 = vmul.f32 %v610, %v650
  %657 = vset.pattern.permute.xlu0 0
  %658 = vperm.xlu0 %657, %v646
  %v659 = vpop.permute.xlu0 %658
  %v661 = vadd.f32 %v652, %v659
  %v662 = vadd.f32 %v653, %v659
  %v663 = vadd.f32 %v654, %v659
  %v664 = vadd.f32 %v655, %v659
  %v665 = vadd.f32 %v661, %v29
  %v666 = vadd.f32 %v662, %v30
  %v667 = vadd.f32 %v663, %v31
  %v668 = vadd.f32 %v664, %v32
  %v669 = vmax.f32 %v665, 0.0
  %v670 = vmax.f32 %v666, 0.0
  %v671 = vmax.f32 %v667, 0.0
  %v672 = vmax.f32 %v668, 0.0
  %673 = vst [vmem:[%s8] sm:$0xff] %v669
  %674 = vst [vmem:[%s8 + $0x8] sm:$0xff] %v670
  %675 = vst [vmem:[%s8 + $0x10] sm:$0xff] %v671
  %676 = vst [vmem:[%s8 + $0x18] sm:$0xff] %v672
  // Predicated region
  $region34: #{basic_block_prim.1} parent=0 // pred_check
    _
  $region35: #{basic_block_prim.1} parent=0 // pred_check_branch
    %678 = sbr.rel (0) target = $region37
  $region36: #{basic_block_prim.1} parent=0 // pred_region
    _
  $region37: #{basic_block_prim.1} parent=0 // pred_fallthru
    _
  // Predicated region
  $region38: #{basic_block_prim.1} parent=0 // pred_check
    _
  $region39: #{basic_block_prim.1} parent=0 // pred_check_branch
    %680 = sbr.rel (0) target = $region41
  $region40: #{basic_block_prim.1} parent=0 // pred_region
    _
  $region41: #{basic_block_prim.1} parent=0 // pred_fallthru
    _

</llo_original>
